<compile_context>
chip_gen: v6e
topology: v6e:2x2x1
jax: 0.10.0
libtpu: 0.0.40
codegen_flags: <defaults>
</compile_context>

<pallas_src>
import jax
import jax.numpy as jnp
from jax.experimental import pallas as pl
from jax.experimental.pallas import tpu as pltpu


def tap30_kernel(x_ref,
                 w1_ref, b1_ref,
                 w2_ref, b2_ref,
                 w3_ref, b3_ref,
                 w4_ref, b4_ref,
                 o_ref):
    """Fused MLP on a (rows, 128) tile; 32 batch elements interleaved per row.

    Weights are block-diagonal kron(I_32, W.T) expansions, so each jnp.dot acts
    independently on every 32-element batch group packed along the lane axis.
    """
    h = x_ref[...]                                                     # (R, 128)

    # Linear(4 -> 10) + ReLU      (W1_bd: (128, 320))
    h = jnp.dot(h, w1_ref[...], preferred_element_type=jnp.float32) + b1_ref[...]
    h = jnp.maximum(h, 0.0)                                            # (R, 320)

    # Linear(10 -> 10) + ReLU     (W2_bd: (320, 320))
    h = jnp.dot(h, w2_ref[...], preferred_element_type=jnp.float32) + b2_ref[...]
    h = jnp.maximum(h, 0.0)                                            # (R, 320)

    # Linear(10 -> 5) + ReLU      (W3_bd: (320, 160))
    h = jnp.dot(h, w3_ref[...], preferred_element_type=jnp.float32) + b3_ref[...]
    h = jnp.maximum(h, 0.0)                                            # (R, 160)

    # Linear(5 -> 1), no activation  (W4_bd: (160, 32))
    y = jnp.dot(h, w4_ref[...], preferred_element_type=jnp.float32) + b4_ref[...]

    o_ref[...] = y.astype(o_ref.dtype)                                 # (R, 32)


def _round_up(n, m):
    return ((n + m - 1) // m) * m


def expand_params_blockdiag(params, group):
    """Expand (W:(out,in), b:(out,1)) into block-diagonal kron(I_group, W.T).

    Tiny (< 1 MiB total); in real use compute once and reuse across calls.
    """
    expanded = []
    for (w, b) in params:
        eye = jnp.eye(group, dtype=w.dtype)
        w_bd = jnp.kron(eye, jnp.transpose(w))            # (group*in, group*out)
        b_bd = jnp.tile(jnp.transpose(b), (1, group))     # (1, group*out)
        expanded.append((w_bd, b_bd))
    return expanded


# Rows per grid step (each row = 32 batch elements) -> up to 65536 batch
# elements per step; double-buffered blocks + intermediates stay well under
# v7x's scoped-VMEM budget (see vmem_limit_bytes below).
_ROW_CAP = 2048


def tap30_forward(x, params, row_cap=_ROW_CAP):
    """x: (batch, in_features) float32. params: list of (W:(out,in), b:(out,1))."""
    batch, in_features = x.shape
    out_features = params[-1][0].shape[0]
    assert 128 % in_features == 0, "lane packing assumes in_features divides 128"
    group = 128 // in_features                          # batch elems per 128-lane row

    (w1, b1), (w2, b2), (w3, b3), (w4, b4) = expand_params_blockdiag(params, group)

    # ---- balanced, lane/sublane-aligned batch tiling -------------------------
    rows_needed = -(-batch // group)
    steps = max(1, -(-rows_needed // row_cap))
    if steps == 1 and rows_needed >= 256:               # batch >= 8192: let both TCs work
        steps = 2
    rows_per_step = _round_up(-(-rows_needed // steps), 8)
    rows = rows_per_step * steps
    padded_batch = rows * group

    # (batch, in) -> (rows, 128) is a free row-major reshape; pad only if needed.
    if padded_batch != batch:
        x = jnp.pad(x, ((0, padded_batch - batch), (0, 0)))
    x2 = x.reshape(rows, group * in_features)

    n_out_lanes = group * out_features

    # Weights/biases: full blocks, constant block index -> fetched once,
    # VMEM-resident across all batch grid steps.
    const = lambda a: pl.BlockSpec(a.shape, lambda i: (0, 0))

    cost = pl.CostEstimate(
        flops=2 * 195 * padded_batch,                    # 195 MACs / element
        transcendentals=0,
        bytes_accessed=padded_batch * 4 * (in_features + out_features),
    )

    out = pl.pallas_call(
        tap30_kernel,
        out_shape=jax.ShapeDtypeStruct((rows, n_out_lanes), jnp.float32),
        grid_spec=pltpu.PrefetchScalarGridSpec(
            num_scalar_prefetch=0,
            grid=(steps,),
            in_specs=[pl.BlockSpec((rows_per_step, group * in_features),
                                   lambda i: (i, 0)),
                      const(w1), const(b1),
                      const(w2), const(b2),
                      const(w3), const(b3),
                      const(w4), const(b4)],
            out_specs=pl.BlockSpec((rows_per_step, n_out_lanes), lambda i: (i, 0)),
        ),
        compiler_params=pltpu.CompilerParams(
            dimension_semantics=("parallel",),
            vmem_limit_bytes=40 * 1024 * 1024),
        cost_estimate=cost,
    )(x2, w1, b1, w2, b2, w3, b3, w4, b4)

    # (rows, group*out) -> (padded_batch, out) is again a free reshape; slice off padding.
    return out.reshape(padded_batch, out_features)[:batch]


def init_params(key, in_features=4, out_features=1):
    """PyTorch nn.Linear-style init (uniform +/- 1/sqrt(fan_in)).
    Weights kept in PyTorch's (out, in) orientation; biases as (out, 1)."""
    dims = [(in_features, 10), (10, 10), (10, 5), (5, out_features)]
    params = []
    for (fan_in, fan_out) in dims:
        key, kw, kb = jax.random.split(key, 3)
        bound = 1.0 / jnp.sqrt(float(fan_in))
        w = jax.random.uniform(kw, (fan_out, fan_in), jnp.float32, -bound, bound)
        b = jax.random.uniform(kb, (fan_out, 1), jnp.float32, -bound, bound)
        params.append((w, b))
    return params


def reference_forward(x, params):
    """Pure-JAX reference (standard (batch, features) layout)."""
    h = x
    for i, (w, b) in enumerate(params):
        h = h @ w.T + b.T
        if i < len(params) - 1:
            h = jnp.maximum(h, 0.0)
    return h


if __name__ == "__main__":
    key = jax.random.PRNGKey(0)
    key, kx = jax.random.split(key)

    batch, in_features, out_features = 8, 4, 1
    x = jax.random.normal(kx, (batch, in_features), jnp.float32)

    params = init_params(key, in_features, out_features)

    y = tap30_forward(x, params)
    y = jax.block_until_ready(y)

    y_ref = reference_forward(x, params)
    assert y.shape == (batch, out_features)
    assert jnp.allclose(y, y_ref, atol=1e-4, rtol=1e-4)

    print("KERNEL_OK")
</pallas_src>

<mosaic_0001>
module attributes {stable_mosaic.version = 11 : i64} {
  func.func @tap30_kernel(%arg0: i32, %arg1: memref<8x128xf32, #tpu.memory_space<vmem>>, %arg2: memref<128x320xf32, #tpu.memory_space<vmem>>, %arg3: memref<1x320xf32, #tpu.memory_space<vmem>>, %arg4: memref<320x320xf32, #tpu.memory_space<vmem>>, %arg5: memref<1x320xf32, #tpu.memory_space<vmem>>, %arg6: memref<320x160xf32, #tpu.memory_space<vmem>>, %arg7: memref<1x160xf32, #tpu.memory_space<vmem>>, %arg8: memref<160x32xf32, #tpu.memory_space<vmem>>, %arg9: memref<1x32xf32, #tpu.memory_space<vmem>>, %arg10: memref<8x32xf32, #tpu.memory_space<vmem>>) attributes {dimension_semantics = [#tpu.dimension_semantics<parallel>], iteration_bounds = array<i64: 1>, scalar_prefetch = 0 : i64, scratch_operands = 0 : i64, tpu.core_type = #tpu.core_type<tc>, window_params = [{transform_indices = @transform_0, window_bounds = array<i64: 8, 128>}, {pipeline_mode = #tpu.pipeline_mode<synchronous>, transform_indices = @transform_1, window_bounds = array<i64: 128, 320>}, {pipeline_mode = #tpu.pipeline_mode<synchronous>, transform_indices = @transform_2, window_bounds = array<i64: 1, 320>}, {pipeline_mode = #tpu.pipeline_mode<synchronous>, transform_indices = @transform_3, window_bounds = array<i64: 320, 320>}, {pipeline_mode = #tpu.pipeline_mode<synchronous>, transform_indices = @transform_4, window_bounds = array<i64: 1, 320>}, {pipeline_mode = #tpu.pipeline_mode<synchronous>, transform_indices = @transform_5, window_bounds = array<i64: 320, 160>}, {pipeline_mode = #tpu.pipeline_mode<synchronous>, transform_indices = @transform_6, window_bounds = array<i64: 1, 160>}, {pipeline_mode = #tpu.pipeline_mode<synchronous>, transform_indices = @transform_7, window_bounds = array<i64: 160, 32>}, {pipeline_mode = #tpu.pipeline_mode<synchronous>, transform_indices = @transform_8, window_bounds = array<i64: 1, 32>}, {transform_indices = @transform_9, window_bounds = array<i64: 8, 32>}]} {
    %c0 = arith.constant 0 : index
    %c0_0 = arith.constant 0 : index
    %0 = vector.load %arg1[%c0, %c0_0] : memref<8x128xf32, #tpu.memory_space<vmem>>, vector<8x128xf32>
    %c0_1 = arith.constant 0 : index
    %c0_2 = arith.constant 0 : index
    %1 = vector.load %arg2[%c0_1, %c0_2] : memref<128x320xf32, #tpu.memory_space<vmem>>, vector<128x320xf32>
    %cst = arith.constant dense<0.000000e+00> : vector<8x320xf32>
    %2 = tpu.matmul %0, %1, %cst {dimension_numbers = #tpu.dot_dimension_numbers<[1], [0], [0], [1], [0, 0, 1, 1], [], []>} : vector<8x128xf32>, vector<128x320xf32>, vector<8x320xf32> -> vector<8x320xf32>
    %c0_3 = arith.constant 0 : index
    %c0_4 = arith.constant 0 : index
    %3 = vector.load %arg3[%c0_3, %c0_4] : memref<1x320xf32, #tpu.memory_space<vmem>>, vector<1x320xf32>
    %4 = vector.broadcast %3 : vector<1x320xf32> to vector<8x320xf32>
    %5 = arith.addf %2, %4 : vector<8x320xf32>
    %cst_5 = arith.constant 0.000000e+00 : f32
    %6 = vector.broadcast %cst_5 : f32 to vector<8x320xf32>
    %7 = arith.maximumf %5, %6 : vector<8x320xf32>
    %c0_6 = arith.constant 0 : index
    %c0_7 = arith.constant 0 : index
    %8 = vector.load %arg4[%c0_6, %c0_7] : memref<320x320xf32, #tpu.memory_space<vmem>>, vector<320x320xf32>
    %cst_8 = arith.constant dense<0.000000e+00> : vector<8x320xf32>
    %9 = tpu.matmul %7, %8, %cst_8 {dimension_numbers = #tpu.dot_dimension_numbers<[1], [0], [0], [1], [0, 0, 1, 1], [], []>} : vector<8x320xf32>, vector<320x320xf32>, vector<8x320xf32> -> vector<8x320xf32>
    %c0_9 = arith.constant 0 : index
    %c0_10 = arith.constant 0 : index
    %10 = vector.load %arg5[%c0_9, %c0_10] : memref<1x320xf32, #tpu.memory_space<vmem>>, vector<1x320xf32>
    %11 = vector.broadcast %10 : vector<1x320xf32> to vector<8x320xf32>
    %12 = arith.addf %9, %11 : vector<8x320xf32>
    %cst_11 = arith.constant 0.000000e+00 : f32
    %13 = vector.broadcast %cst_11 : f32 to vector<8x320xf32>
    %14 = arith.maximumf %12, %13 : vector<8x320xf32>
    %c0_12 = arith.constant 0 : index
    %c0_13 = arith.constant 0 : index
    %15 = vector.load %arg6[%c0_12, %c0_13] : memref<320x160xf32, #tpu.memory_space<vmem>>, vector<320x160xf32>
    %cst_14 = arith.constant dense<0.000000e+00> : vector<8x160xf32>
    %16 = tpu.matmul %14, %15, %cst_14 {dimension_numbers = #tpu.dot_dimension_numbers<[1], [0], [0], [1], [0, 0, 1, 1], [], []>} : vector<8x320xf32>, vector<320x160xf32>, vector<8x160xf32> -> vector<8x160xf32>
    %c0_15 = arith.constant 0 : index
    %c0_16 = arith.constant 0 : index
    %17 = vector.load %arg7[%c0_15, %c0_16] : memref<1x160xf32, #tpu.memory_space<vmem>>, vector<1x160xf32>
    %18 = vector.broadcast %17 : vector<1x160xf32> to vector<8x160xf32>
    %19 = arith.addf %16, %18 : vector<8x160xf32>
    %cst_17 = arith.constant 0.000000e+00 : f32
    %20 = vector.broadcast %cst_17 : f32 to vector<8x160xf32>
    %21 = arith.maximumf %19, %20 : vector<8x160xf32>
    %c0_18 = arith.constant 0 : index
    %c0_19 = arith.constant 0 : index
    %22 = vector.load %arg8[%c0_18, %c0_19] : memref<160x32xf32, #tpu.memory_space<vmem>>, vector<160x32xf32>
    %cst_20 = arith.constant dense<0.000000e+00> : vector<8x32xf32>
    %23 = tpu.matmul %21, %22, %cst_20 {dimension_numbers = #tpu.dot_dimension_numbers<[1], [0], [0], [1], [0, 0, 1, 1], [], []>} : vector<8x160xf32>, vector<160x32xf32>, vector<8x32xf32> -> vector<8x32xf32>
    %c0_21 = arith.constant 0 : index
    %c0_22 = arith.constant 0 : index
    %24 = vector.load %arg9[%c0_21, %c0_22] : memref<1x32xf32, #tpu.memory_space<vmem>>, vector<1x32xf32>
    %25 = vector.broadcast %24 : vector<1x32xf32> to vector<8x32xf32>
    %26 = arith.addf %23, %25 : vector<8x32xf32>
    %c0_23 = arith.constant 0 : index
    %c0_24 = arith.constant 0 : index
    %27 = vector.load %arg10[%c0_23, %c0_24] : memref<8x32xf32, #tpu.memory_space<vmem>>, vector<8x32xf32>
    tpu.vector_store %arg10[%c0_23, %c0_24], %26 {strides = array<i32>} : memref<8x32xf32, #tpu.memory_space<vmem>>, vector<8x32xf32>,
    return
  }
  func.func @transform_0(%arg0: i32) -> (i32, i32) {
    %c0_i32 = arith.constant 0 : i32
    %c0_i32_0 = arith.constant 0 : i32
    return %arg0, %c0_i32 : i32, i32
  }
  func.func @transform_1(%arg0: i32) -> (i32, i32) {
    %c0_i32 = arith.constant 0 : i32
    %c0_i32_0 = arith.constant 0 : i32
    %c0_i32_1 = arith.constant 0 : i32
    return %c0_i32, %c0_i32_0 : i32, i32
  }
  func.func @transform_2(%arg0: i32) -> (i32, i32) {
    %c0_i32 = arith.constant 0 : i32
    %c0_i32_0 = arith.constant 0 : i32
    %c0_i32_1 = arith.constant 0 : i32
    return %c0_i32, %c0_i32_0 : i32, i32
  }
  func.func @transform_3(%arg0: i32) -> (i32, i32) {
    %c0_i32 = arith.constant 0 : i32
    %c0_i32_0 = arith.constant 0 : i32
    %c0_i32_1 = arith.constant 0 : i32
    return %c0_i32, %c0_i32_0 : i32, i32
  }
  func.func @transform_4(%arg0: i32) -> (i32, i32) {
    %c0_i32 = arith.constant 0 : i32
    %c0_i32_0 = arith.constant 0 : i32
    %c0_i32_1 = arith.constant 0 : i32
    return %c0_i32, %c0_i32_0 : i32, i32
  }
  func.func @transform_5(%arg0: i32) -> (i32, i32) {
    %c0_i32 = arith.constant 0 : i32
    %c0_i32_0 = arith.constant 0 : i32
    %c0_i32_1 = arith.constant 0 : i32
    return %c0_i32, %c0_i32_0 : i32, i32
  }
  func.func @transform_6(%arg0: i32) -> (i32, i32) {
    %c0_i32 = arith.constant 0 : i32
    %c0_i32_0 = arith.constant 0 : i32
    %c0_i32_1 = arith.constant 0 : i32
    return %c0_i32, %c0_i32_0 : i32, i32
  }
  func.func @transform_7(%arg0: i32) -> (i32, i32) {
    %c0_i32 = arith.constant 0 : i32
    %c0_i32_0 = arith.constant 0 : i32
    %c0_i32_1 = arith.constant 0 : i32
    return %c0_i32, %c0_i32_0 : i32, i32
  }
  func.func @transform_8(%arg0: i32) -> (i32, i32) {
    %c0_i32 = arith.constant 0 : i32
    %c0_i32_0 = arith.constant 0 : i32
    %c0_i32_1 = arith.constant 0 : i32
    return %c0_i32, %c0_i32_0 : i32, i32
  }
  func.func @transform_9(%arg0: i32) -> (i32, i32) {
    %c0_i32 = arith.constant 0 : i32
    %c0_i32_0 = arith.constant 0 : i32
    return %arg0, %c0_i32 : i32, i32
  }
}

</mosaic_0001>

<llo_original>
// kernel: tpu_custom_call.1
$region0: #{tpu_custom_call.1}
  #allocation0 [shape = 'u32[]', space=smem, size = 0x4, offset = 0x4, fixed_abs, tag = 'smem constant byte address 0x4 - core index']
  #allocation1 [shape = 'u32[144,128]{1,0:T(1,128)}', space=vmem, size = 0x12000, scoped, tag = 'internal scratch']
  %s0 = inlined_call_operand.vmem [shape: f32[8,128], index: 0, kind: input, shape index: {}]
  %s1 = inlined_call_operand.vmem [shape: f32[128,320], index: 1, kind: input, shape index: {}]
  %s2 = inlined_call_operand.vmem [shape: f32[1,320], index: 2, kind: input, shape index: {}]
  %s3 = inlined_call_operand.vmem [shape: f32[320,320], index: 3, kind: input, shape index: {}]
  %s4 = inlined_call_operand.vmem [shape: f32[1,320], index: 4, kind: input, shape index: {}]
  %s5 = inlined_call_operand.vmem [shape: f32[320,160], index: 5, kind: input, shape index: {}]
  %s6 = inlined_call_operand.vmem [shape: f32[1,160], index: 6, kind: input, shape index: {}]
  %s7 = inlined_call_operand.vmem [shape: f32[160,32], index: 7, kind: input, shape index: {}]
  %s8 = inlined_call_operand.vmem [shape: f32[1,32], index: 8, kind: input, shape index: {}]
  %s9 = inlined_call_operand.hbm [shape: f32[8,32], index: 9, kind: output, shape index: {}]
  %s10 = sld [smem:[#allocation0]]
  $region46: #{tpu_custom_call.1} parent=0
    _
  %s12 = ssub.s32 1, %s10
  %s13 = scalar_select 0, %s12, %s10
  $region1: #{tpu_custom_call.1} parent=0
    #allocation2 [shape = 'u8[4096]{0}', space=vmem, size = 0x1000, scoped, tag = 'output window, operand 0, single buffered']
    #allocation3 [shape = 's32[1]{0}', space=sflag, size = 0x4, scoped, tag = 'scoped memory for tpu_custom_call.1']
    %14 = vsyncpa [#allocation3], 0
    // Predicated region
    $region2: #{tpu_custom_call.1} parent=1 // pred_check
      _
    $region3: #{tpu_custom_call.1} parent=1 // pred_check_branch
      %16 = sbr.rel (0) target = $region5
    $region4: #{tpu_custom_call.1} parent=1 // pred_region
      _
    $region5: #{tpu_custom_call.1} parent=1 // pred_fallthru
      _
    // Predicated region
    $region6: #{tpu_custom_call.1} parent=1 // pred_check
      _
    $region7: #{tpu_custom_call.1} parent=1 // pred_check_branch
      %18 = sbr.rel (0) target = $region9
    $region8: #{tpu_custom_call.1} parent=1 // pred_region
      _
    $region9: #{tpu_custom_call.1} parent=1 // pred_fallthru
      _
    // Predicated region
    $region10: #{tpu_custom_call.1} parent=1 // pred_check
      _
    $region11: #{tpu_custom_call.1} parent=1 // pred_check_branch
      %20 = sbr.rel (0) target = $region13
    $region12: #{tpu_custom_call.1} parent=1 // pred_region
      _
    $region13: #{tpu_custom_call.1} parent=1 // pred_fallthru
      _
    // Predicated region
    $region14: #{tpu_custom_call.1} parent=1 // pred_check
      _
    $region15: #{tpu_custom_call.1} parent=1 // pred_check_branch
      %22 = sbr.rel (0) target = $region17
    $region16: #{tpu_custom_call.1} parent=1 // pred_region
      _
    $region17: #{tpu_custom_call.1} parent=1 // pred_fallthru
      _
    // Predicated region
    $region18: #{tpu_custom_call.1} parent=1 // pred_check
      _
    $region19: #{tpu_custom_call.1} parent=1 // pred_check_branch
      %24 = sbr.rel (0) target = $region21
    $region20: #{tpu_custom_call.1} parent=1 // pred_region
      _
    $region21: #{tpu_custom_call.1} parent=1 // pred_fallthru
      _
    // Predicated region
    $region22: #{tpu_custom_call.1} parent=1 // pred_check
      _
    $region23: #{tpu_custom_call.1} parent=1 // pred_check_branch
      %26 = sbr.rel (0) target = $region25
    $region24: #{tpu_custom_call.1} parent=1 // pred_region
      _
    $region25: #{tpu_custom_call.1} parent=1 // pred_fallthru
      _
    // Predicated region
    $region26: #{tpu_custom_call.1} parent=1 // pred_check
      _
    $region27: #{tpu_custom_call.1} parent=1 // pred_check_branch
      %28 = sbr.rel (0) target = $region29
    $region28: #{tpu_custom_call.1} parent=1 // pred_region
      _
    $region29: #{tpu_custom_call.1} parent=1 // pred_fallthru
      _
    // Predicated region
    $region30: #{tpu_custom_call.1} parent=1 // pred_check
      _
    $region31: #{tpu_custom_call.1} parent=1 // pred_check_branch
      %30 = sbr.rel (0) target = $region33
    $region32: #{tpu_custom_call.1} parent=1 // pred_region
      _
    $region33: #{tpu_custom_call.1} parent=1 // pred_fallthru
      _
    // Predicated region
    $region34: #{tpu_custom_call.1} parent=1 // pred_check
      _
    $region35: #{tpu_custom_call.1} parent=1 // pred_check_branch
      %32 = sbr.rel (0) target = $region37
    $region36: #{tpu_custom_call.1} parent=1 // pred_region
      _
    $region37: #{tpu_custom_call.1} parent=1 // pred_fallthru
      _
    %v33 = vld [vmem:[%s0] sm:$0xff]
    %v34 = vld [vmem:[%s1] sm:$0xff]
    %v35 = vld [vmem:[%s1 + $0x8] sm:$0xff]
    %v36 = vld [vmem:[%s1 + $0x10] sm:$0xff]
    %v37 = vld [vmem:[%s1 + $0x18] sm:$0xff]
    %v38 = vld [vmem:[%s1 + $0x20] sm:$0xff]
    %v39 = vld [vmem:[%s1 + $0x28] sm:$0xff]
    %v40 = vld [vmem:[%s1 + $0x30] sm:$0xff]
    %v41 = vld [vmem:[%s1 + $0x38] sm:$0xff]
    %v42 = vld [vmem:[%s1 + $0x40] sm:$0xff]
    %v43 = vld [vmem:[%s1 + $0x48] sm:$0xff]
    %v44 = vld [vmem:[%s1 + $0x50] sm:$0xff]
    %v45 = vld [vmem:[%s1 + $0x58] sm:$0xff]
    %v46 = vld [vmem:[%s1 + $0x60] sm:$0xff]
    %v47 = vld [vmem:[%s1 + $0x68] sm:$0xff]
    %v48 = vld [vmem:[%s1 + $0x70] sm:$0xff]
    %v49 = vld [vmem:[%s1 + $0x78] sm:$0xff]
    %v50 = vld [vmem:[%s1 + $0x80] sm:$0xff]
    %v51 = vld [vmem:[%s1 + $0x88] sm:$0xff]
    %v52 = vld [vmem:[%s1 + $0x90] sm:$0xff]
    %v53 = vld [vmem:[%s1 + $0x98] sm:$0xff]
    %v54 = vld [vmem:[%s1 + $0xa0] sm:$0xff]
    %v55 = vld [vmem:[%s1 + $0xa8] sm:$0xff]
    %v56 = vld [vmem:[%s1 + $0xb0] sm:$0xff]
    %v57 = vld [vmem:[%s1 + $0xb8] sm:$0xff]
    %v58 = vld [vmem:[%s1 + $0xc0] sm:$0xff]
    %v59 = vld [vmem:[%s1 + $0xc8] sm:$0xff]
    %v60 = vld [vmem:[%s1 + $0xd0] sm:$0xff]
    %v61 = vld [vmem:[%s1 + $0xd8] sm:$0xff]
    %v62 = vld [vmem:[%s1 + $0xe0] sm:$0xff]
    %v63 = vld [vmem:[%s1 + $0xe8] sm:$0xff]
    %v64 = vld [vmem:[%s1 + $0xf0] sm:$0xff]
    %v65 = vld [vmem:[%s1 + $0xf8] sm:$0xff]
    %v66 = vld [vmem:[%s1 + $0x100] sm:$0xff]
    %v67 = vld [vmem:[%s1 + $0x108] sm:$0xff]
    %v68 = vld [vmem:[%s1 + $0x110] sm:$0xff]
    %v69 = vld [vmem:[%s1 + $0x118] sm:$0xff]
    %v70 = vld [vmem:[%s1 + $0x120] sm:$0xff]
    %v71 = vld [vmem:[%s1 + $0x128] sm:$0xff]
    %v72 = vld [vmem:[%s1 + $0x130] sm:$0xff]
    %v73 = vld [vmem:[%s1 + $0x138] sm:$0xff]
    %v74 = vld [vmem:[%s1 + $0x140] sm:$0xff]
    %v75 = vld [vmem:[%s1 + $0x148] sm:$0xff]
    %v76 = vld [vmem:[%s1 + $0x150] sm:$0xff]
    %v77 = vld [vmem:[%s1 + $0x158] sm:$0xff]
    %v78 = vld [vmem:[%s1 + $0x160] sm:$0xff]
    %v79 = vld [vmem:[%s1 + $0x168] sm:$0xff]
    %v80 = vld [vmem:[%s1 + $0x170] sm:$0xff]
    %v81 = vld [vmem:[%s1 + $0x178] sm:$0xff]
    %v82 = vld [vmem:[%s2] sm:$0x7]
    %v84 = vlaneseq
    %v85 = vshrl.u32 %v84, 7
    %v86 = vsub.s32 0, %v85
    %v87 = vrot.slane %v82, %v86
    %v88 = vlaneseq
    %v89 = vshrl.u32 %v88, 7
    %v90 = vsub.s32 1, %v89
    %v91 = vrot.slane %v82, %v90
    %v92 = vlaneseq
    %v93 = vshrl.u32 %v92, 7
    %v94 = vsub.s32 2, %v93
    %v95 = vrot.slane %v82, %v94
    %99 = vmatprep.subr.mxu0 %v80
    %100 = vmatpush1.msra.mxu0 %v79
    %101 = vmatprep.subr.mxu0 %v77
    %102 = vmatpush1.msra.mxu0 %v76
    %103 = vmatprep.subr.mxu0 %v74
    %104 = vmatpush1.msra.mxu0 %v73
    %105 = vmatprep.subr.mxu0 %v71
    %106 = vmatpush1.msra.mxu0 %v70
    %107 = vmatprep.subr.mxu0 %v68
    %108 = vmatpush1.msra.mxu0 %v67
    %109 = vmatprep.subr.mxu0 %v65
    %110 = vmatpush1.msra.mxu0 %v64
    %111 = vmatprep.subr.mxu0 %v62
    %112 = vmatpush1.msra.mxu0 %v61
    %113 = vmatprep.subr.mxu0 %v59
    %114 = vmatpush1.msra.mxu0 %v58
    %115 = vmatprep.subr.mxu0 %v56
    %116 = vmatpush1.msra.mxu0 %v55
    %117 = vmatprep.subr.mxu0 %v53
    %118 = vmatpush1.msra.mxu0 %v52
    %119 = vmatprep.subr.mxu0 %v50
    %120 = vmatpush1.msra.mxu0 %v49
    %121 = vmatprep.subr.mxu0 %v47
    %122 = vmatpush1.msra.mxu0 %v46
    %123 = vmatprep.subr.mxu0 %v44
    %124 = vmatpush1.msra.mxu0 %v43
    %125 = vmatprep.subr.mxu0 %v41
    %126 = vmatpush1.msra.mxu0 %v40
    %127 = vmatprep.subr.mxu0 %v38
    %128 = vmatpush1.msra.mxu0 %v37
    %129 = vmatprep.subr.mxu0 %v35
    %130 = vmatpush1.msra.mxu0 %v34
    %131 = vmatprep.subr.mxu0 0.0
    %132 = vmatpush2.msra.mxu0 0.0
    %133 = vmatprep.subr.mxu0 0.0
    %134 = vmatpush2.msra.mxu0 0.0
    %135 = vmatprep.subr.mxu0 0.0
    %136 = vmatpush2.msra.mxu0 0.0
    %137 = vmatprep.subr.mxu0 0.0
    %138 = vmatpush2.msra.mxu0 0.0
    %139 = vmatprep.subr.mxu0 0.0
    %140 = vmatpush2.msra.mxu0 0.0
    %141 = vmatprep.subr.mxu0 0.0
    %142 = vmatpush2.msra.mxu0 0.0
    %143 = vmatprep.subr.mxu0 0.0
    %144 = vmatpush2.msra.mxu0 0.0
    %145 = vmatprep.subr.mxu0 0.0
    %146 = vmatpush2.msra.mxu0 0.0
    %147 = vmatprep.subr.mxu0 0.0
    %148 = vmatpush2.msra.mxu0 0.0
    %149 = vmatprep.subr.mxu0 0.0
    %150 = vmatpush2.msra.mxu0 0.0
    %151 = vmatprep.subr.mxu0 0.0
    %152 = vmatpush2.msra.mxu0 0.0
    %153 = vmatprep.subr.mxu0 0.0
    %154 = vmatpush2.msra.mxu0 0.0
    %155 = vmatprep.subr.mxu0 0.0
    %156 = vmatpush2.msra.mxu0 0.0
    %157 = vmatprep.subr.mxu0 0.0
    %158 = vmatpush2.msra.mxu0 0.0
    %159 = vmatprep.subr.mxu0 0.0
    %160 = vmatpush2.msra.mxu0 0.0
    %161 = vmatprep.subr.mxu0 0.0
    %162 = vmatpush2.msra.mxu0 0.0
    %163 = vmatprep.mubr.f32.mxu0 0.0
    %164 = vmatmul.mubr.f32.gmra.mxu0 %v33
    %v165 = vpop.f32.mrf.mxu0
    %v166 = vadd.f32 %v87, %v165
    %v167 = vpop.f32.mrf.mxu0
    %v168 = vadd.f32 %v91, %v167
    %169 = vdwg.mxu0
    %170 = vmatprep.subr.mxu0 0.0
    %171 = vmatpush1.msra.mxu0 %v81
    %172 = vmatprep.subr.mxu0 0.0
    %173 = vmatpush1.msra.mxu0 %v78
    %174 = vmatprep.subr.mxu0 0.0
    %175 = vmatpush1.msra.mxu0 %v75
    %176 = vmatprep.subr.mxu0 0.0
    %177 = vmatpush1.msra.mxu0 %v72
    %178 = vmatprep.subr.mxu0 0.0
    %179 = vmatpush1.msra.mxu0 %v69
    %180 = vmatprep.subr.mxu0 0.0
    %181 = vmatpush1.msra.mxu0 %v66
    %182 = vmatprep.subr.mxu0 0.0
    %183 = vmatpush1.msra.mxu0 %v63
    %184 = vmatprep.subr.mxu0 0.0
    %185 = vmatpush1.msra.mxu0 %v60
    %186 = vmatprep.subr.mxu0 0.0
    %187 = vmatpush1.msra.mxu0 %v57
    %188 = vmatprep.subr.mxu0 0.0
    %189 = vmatpush1.msra.mxu0 %v54
    %190 = vmatprep.subr.mxu0 0.0
    %191 = vmatpush1.msra.mxu0 %v51
    %192 = vmatprep.subr.mxu0 0.0
    %193 = vmatpush1.msra.mxu0 %v48
    %194 = vmatprep.subr.mxu0 0.0
    %195 = vmatpush1.msra.mxu0 %v45
    %196 = vmatprep.subr.mxu0 0.0
    %197 = vmatpush1.msra.mxu0 %v42
    %198 = vmatprep.subr.mxu0 0.0
    %199 = vmatpush1.msra.mxu0 %v39
    %200 = vmatprep.subr.mxu0 0.0
    %201 = vmatpush1.msra.mxu0 %v36
    %202 = vmatprep.subr.mxu0 0.0
    %203 = vmatpush2.msra.mxu0 0.0
    %204 = vmatprep.subr.mxu0 0.0
    %205 = vmatpush2.msra.mxu0 0.0
    %206 = vmatprep.subr.mxu0 0.0
    %207 = vmatpush2.msra.mxu0 0.0
    %208 = vmatprep.subr.mxu0 0.0
    %209 = vmatpush2.msra.mxu0 0.0
    %210 = vmatprep.subr.mxu0 0.0
    %211 = vmatpush2.msra.mxu0 0.0
    %212 = vmatprep.subr.mxu0 0.0
    %213 = vmatpush2.msra.mxu0 0.0
    %214 = vmatprep.subr.mxu0 0.0
    %215 = vmatpush2.msra.mxu0 0.0
    %216 = vmatprep.subr.mxu0 0.0
    %217 = vmatpush2.msra.mxu0 0.0
    %218 = vmatprep.subr.mxu0 0.0
    %219 = vmatpush2.msra.mxu0 0.0
    %220 = vmatprep.subr.mxu0 0.0
    %221 = vmatpush2.msra.mxu0 0.0
    %222 = vmatprep.subr.mxu0 0.0
    %223 = vmatpush2.msra.mxu0 0.0
    %224 = vmatprep.subr.mxu0 0.0
    %225 = vmatpush2.msra.mxu0 0.0
    %226 = vmatprep.subr.mxu0 0.0
    %227 = vmatpush2.msra.mxu0 0.0
    %228 = vmatprep.subr.mxu0 0.0
    %229 = vmatpush2.msra.mxu0 0.0
    %230 = vmatprep.subr.mxu0 0.0
    %231 = vmatpush2.msra.mxu0 0.0
    %232 = vmatprep.subr.mxu0 0.0
    %233 = vmatpush2.msra.mxu0 0.0
    %234 = vmatprep.mubr.f32.mxu0 0.0
    %235 = vmatmul.mubr.f32.gmra.mxu0 %v33
    %v236 = vpop.f32.mrf.mxu0
    %v237 = vadd.f32 %v95, %v236
    %v238 = vpop.f32.mrf.mxu0
    %239 = vdwg.mxu0
    %v240 = vmax.f32 %v166, 0.0
    %v241 = vmax.f32 %v168, 0.0
    %v242 = vmax.f32 %v237, 0.0
    %v243 = vld [vmem:[%s3] sm:$0xff]
    %v244 = vld [vmem:[%s3 + $0x8] sm:$0xff]
    %v245 = vld [vmem:[%s3 + $0x10] sm:$0xff]
    %v246 = vld [vmem:[%s3 + $0x18] sm:$0xff]
    %v247 = vld [vmem:[%s3 + $0x20] sm:$0xff]
    %v248 = vld [vmem:[%s3 + $0x28] sm:$0xff]
    %v249 = vld [vmem:[%s3 + $0x30] sm:$0xff]
    %v250 = vld [vmem:[%s3 + $0x38] sm:$0xff]
    %v251 = vld [vmem:[%s3 + $0x40] sm:$0xff]
    %v252 = vld [vmem:[%s3 + $0x48] sm:$0xff]
    %v253 = vld [vmem:[%s3 + $0x50] sm:$0xff]
    %v254 = vld [vmem:[%s3 + $0x58] sm:$0xff]
    %v255 = vld [vmem:[%s3 + $0x60] sm:$0xff]
    %v256 = vld [vmem:[%s3 + $0x68] sm:$0xff]
    %v257 = vld [vmem:[%s3 + $0x70] sm:$0xff]
    %v258 = vld [vmem:[%s3 + $0x78] sm:$0xff]
    %v259 = vld [vmem:[%s3 + $0x80] sm:$0xff]
    %v260 = vld [vmem:[%s3 + $0x88] sm:$0xff]
    %v261 = vld [vmem:[%s3 + $0x90] sm:$0xff]
    %v262 = vld [vmem:[%s3 + $0x98] sm:$0xff]
    %v263 = vld [vmem:[%s3 + $0xa0] sm:$0xff]
    %v264 = vld [vmem:[%s3 + $0xa8] sm:$0xff]
    %v265 = vld [vmem:[%s3 + $0xb0] sm:$0xff]
    %v266 = vld [vmem:[%s3 + $0xb8] sm:$0xff]
    %v267 = vld [vmem:[%s3 + $0xc0] sm:$0xff]
    %v268 = vld [vmem:[%s3 + $0xc8] sm:$0xff]
    %v269 = vld [vmem:[%s3 + $0xd0] sm:$0xff]
    %v270 = vld [vmem:[%s3 + $0xd8] sm:$0xff]
    %v271 = vld [vmem:[%s3 + $0xe0] sm:$0xff]
    %v272 = vld [vmem:[%s3 + $0xe8] sm:$0xff]
    %v273 = vld [vmem:[%s3 + $0xf0] sm:$0xff]
    %v274 = vld [vmem:[%s3 + $0xf8] sm:$0xff]
    %v275 = vld [vmem:[%s3 + $0x100] sm:$0xff]
    %v276 = vld [vmem:[%s3 + $0x108] sm:$0xff]
    %v277 = vld [vmem:[%s3 + $0x110] sm:$0xff]
    %v278 = vld [vmem:[%s3 + $0x118] sm:$0xff]
    %v279 = vld [vmem:[%s3 + $0x120] sm:$0xff]
    %v280 = vld [vmem:[%s3 + $0x128] sm:$0xff]
    %v281 = vld [vmem:[%s3 + $0x130] sm:$0xff]
    %v282 = vld [vmem:[%s3 + $0x138] sm:$0xff]
    %v283 = vld [vmem:[%s3 + $0x140] sm:$0xff]
    %v284 = vld [vmem:[%s3 + $0x148] sm:$0xff]
    %v285 = vld [vmem:[%s3 + $0x150] sm:$0xff]
    %v286 = vld [vmem:[%s3 + $0x158] sm:$0xff]
    %v287 = vld [vmem:[%s3 + $0x160] sm:$0xff]
    %v288 = vld [vmem:[%s3 + $0x168] sm:$0xff]
    %v289 = vld [vmem:[%s3 + $0x170] sm:$0xff]
    %v290 = vld [vmem:[%s3 + $0x178] sm:$0xff]
    %v291 = vld [vmem:[%s3 + $0x180] sm:$0xff]
    %v292 = vld [vmem:[%s3 + $0x188] sm:$0xff]
    %v293 = vld [vmem:[%s3 + $0x190] sm:$0xff]
    %v294 = vld [vmem:[%s3 + $0x198] sm:$0xff]
    %v295 = vld [vmem:[%s3 + $0x1a0] sm:$0xff]
    %v296 = vld [vmem:[%s3 + $0x1a8] sm:$0xff]
    %v297 = vld [vmem:[%s3 + $0x1b0] sm:$0xff]
    %v298 = vld [vmem:[%s3 + $0x1b8] sm:$0xff]
    %v299 = vld [vmem:[%s3 + $0x1c0] sm:$0xff]
    %v300 = vld [vmem:[%s3 + $0x1c8] sm:$0xff]
    %v301 = vld [vmem:[%s3 + $0x1d0] sm:$0xff]
    %v302 = vld [vmem:[%s3 + $0x1d8] sm:$0xff]
    %v303 = vld [vmem:[%s3 + $0x1e0] sm:$0xff]
    %v304 = vld [vmem:[%s3 + $0x1e8] sm:$0xff]
    %v305 = vld [vmem:[%s3 + $0x1f0] sm:$0xff]
    %v306 = vld [vmem:[%s3 + $0x1f8] sm:$0xff]
    %v307 = vld [vmem:[%s3 + $0x200] sm:$0xff]
    %v308 = vld [vmem:[%s3 + $0x208] sm:$0xff]
    %v309 = vld [vmem:[%s3 + $0x210] sm:$0xff]
    %v310 = vld [vmem:[%s3 + $0x218] sm:$0xff]
    %v311 = vld [vmem:[%s3 + $0x220] sm:$0xff]
    %v312 = vld [vmem:[%s3 + $0x228] sm:$0xff]
    %v313 = vld [vmem:[%s3 + $0x230] sm:$0xff]
    %v314 = vld [vmem:[%s3 + $0x238] sm:$0xff]
    %v315 = vld [vmem:[%s3 + $0x240] sm:$0xff]
    %v316 = vld [vmem:[%s3 + $0x248] sm:$0xff]
    %v317 = vld [vmem:[%s3 + $0x250] sm:$0xff]
    %v318 = vld [vmem:[%s3 + $0x258] sm:$0xff]
    %v319 = vld [vmem:[%s3 + $0x260] sm:$0xff]
    %v320 = vld [vmem:[%s3 + $0x268] sm:$0xff]
    %v321 = vld [vmem:[%s3 + $0x270] sm:$0xff]
    %v322 = vld [vmem:[%s3 + $0x278] sm:$0xff]
    %v323 = vld [vmem:[%s3 + $0x280] sm:$0xff]
    %v324 = vld [vmem:[%s3 + $0x288] sm:$0xff]
    %v325 = vld [vmem:[%s3 + $0x290] sm:$0xff]
    %v326 = vld [vmem:[%s3 + $0x298] sm:$0xff]
    %v327 = vld [vmem:[%s3 + $0x2a0] sm:$0xff]
    %v328 = vld [vmem:[%s3 + $0x2a8] sm:$0xff]
    %v329 = vld [vmem:[%s3 + $0x2b0] sm:$0xff]
    %v330 = vld [vmem:[%s3 + $0x2b8] sm:$0xff]
    %v331 = vld [vmem:[%s3 + $0x2c0] sm:$0xff]
    %v332 = vld [vmem:[%s3 + $0x2c8] sm:$0xff]
    %v333 = vld [vmem:[%s3 + $0x2d0] sm:$0xff]
    %v334 = vld [vmem:[%s3 + $0x2d8] sm:$0xff]
    %v335 = vld [vmem:[%s3 + $0x2e0] sm:$0xff]
    %v336 = vld [vmem:[%s3 + $0x2e8] sm:$0xff]
    %v337 = vld [vmem:[%s3 + $0x2f0] sm:$0xff]
    %v338 = vld [vmem:[%s3 + $0x2f8] sm:$0xff]
    %v339 = vld [vmem:[%s3 + $0x300] sm:$0xff]
    %v340 = vld [vmem:[%s3 + $0x308] sm:$0xff]
    %v341 = vld [vmem:[%s3 + $0x310] sm:$0xff]
    %v342 = vld [vmem:[%s3 + $0x318] sm:$0xff]
    %v343 = vld [vmem:[%s3 + $0x320] sm:$0xff]
    %v344 = vld [vmem:[%s3 + $0x328] sm:$0xff]
    %v345 = vld [vmem:[%s3 + $0x330] sm:$0xff]
    %v346 = vld [vmem:[%s3 + $0x338] sm:$0xff]
    %v347 = vld [vmem:[%s3 + $0x340] sm:$0xff]
    %v348 = vld [vmem:[%s3 + $0x348] sm:$0xff]
    %v349 = vld [vmem:[%s3 + $0x350] sm:$0xff]
    %v350 = vld [vmem:[%s3 + $0x358] sm:$0xff]
    %v351 = vld [vmem:[%s3 + $0x360] sm:$0xff]
    %v352 = vld [vmem:[%s3 + $0x368] sm:$0xff]
    %v353 = vld [vmem:[%s3 + $0x370] sm:$0xff]
    %v354 = vld [vmem:[%s3 + $0x378] sm:$0xff]
    %v355 = vld [vmem:[%s3 + $0x380] sm:$0xff]
    %v356 = vld [vmem:[%s3 + $0x388] sm:$0xff]
    %v357 = vld [vmem:[%s3 + $0x390] sm:$0xff]
    %v358 = vld [vmem:[%s3 + $0x398] sm:$0xff]
    %v359 = vld [vmem:[%s3 + $0x3a0] sm:$0xff]
    %v360 = vld [vmem:[%s3 + $0x3a8] sm:$0xff]
    %v361 = vld [vmem:[%s3 + $0x3b0] sm:$0xff]
    %v362 = vld [vmem:[%s3 + $0x3b8] sm:$0xff]
    %v363 = vld [vmem:[%s4] sm:$0x7]
    %v365 = vlaneseq
    %v366 = vshrl.u32 %v365, 7
    %v367 = vsub.s32 0, %v366
    %v368 = vrot.slane %v363, %v367
    %v369 = vlaneseq
    %v370 = vshrl.u32 %v369, 7
    %v371 = vsub.s32 1, %v370
    %v372 = vrot.slane %v363, %v371
    %v373 = vlaneseq
    %v374 = vshrl.u32 %v373, 7
    %v375 = vsub.s32 2, %v374
    %v376 = vrot.slane %v363, %v375
    %vm380 = vcmask 523264
    %v382 = vsel %vm380, %v242, 0
    %384 = vmatprep.subr.mxu0 %v289
    %385 = vmatpush1.msra.mxu0 %v288
    %386 = vmatprep.subr.mxu0 %v286
    %387 = vmatpush1.msra.mxu0 %v285
    %388 = vmatprep.subr.mxu0 %v283
    %389 = vmatpush1.msra.mxu0 %v282
    %390 = vmatprep.subr.mxu0 %v280
    %391 = vmatpush1.msra.mxu0 %v279
    %392 = vmatprep.subr.mxu0 %v277
    %393 = vmatpush1.msra.mxu0 %v276
    %394 = vmatprep.subr.mxu0 %v274
    %395 = vmatpush1.msra.mxu0 %v273
    %396 = vmatprep.subr.mxu0 %v271
    %397 = vmatpush1.msra.mxu0 %v270
    %398 = vmatprep.subr.mxu0 %v268
    %399 = vmatpush1.msra.mxu0 %v267
    %400 = vmatprep.subr.mxu0 %v265
    %401 = vmatpush1.msra.mxu0 %v264
    %402 = vmatprep.subr.mxu0 %v262
    %403 = vmatpush1.msra.mxu0 %v261
    %404 = vmatprep.subr.mxu0 %v259
    %405 = vmatpush1.msra.mxu0 %v258
    %406 = vmatprep.subr.mxu0 %v256
    %407 = vmatpush1.msra.mxu0 %v255
    %408 = vmatprep.subr.mxu0 %v253
    %409 = vmatpush1.msra.mxu0 %v252
    %410 = vmatprep.subr.mxu0 %v250
    %411 = vmatpush1.msra.mxu0 %v249
    %412 = vmatprep.subr.mxu0 %v247
    %413 = vmatpush1.msra.mxu0 %v246
    %414 = vmatprep.subr.mxu0 %v244
    %415 = vmatpush1.msra.mxu0 %v243
    %416 = vmatprep.subr.mxu0 %v337
    %417 = vmatpush2.msra.mxu0 %v336
    %418 = vmatprep.subr.mxu0 %v334
    %419 = vmatpush2.msra.mxu0 %v333
    %420 = vmatprep.subr.mxu0 %v331
    %421 = vmatpush2.msra.mxu0 %v330
    %422 = vmatprep.subr.mxu0 %v328
    %423 = vmatpush2.msra.mxu0 %v327
    %424 = vmatprep.subr.mxu0 %v325
    %425 = vmatpush2.msra.mxu0 %v324
    %426 = vmatprep.subr.mxu0 %v322
    %427 = vmatpush2.msra.mxu0 %v321
    %428 = vmatprep.subr.mxu0 %v319
    %429 = vmatpush2.msra.mxu0 %v318
    %430 = vmatprep.subr.mxu0 %v316
    %431 = vmatpush2.msra.mxu0 %v315
    %432 = vmatprep.subr.mxu0 %v313
    %433 = vmatpush2.msra.mxu0 %v312
    %434 = vmatprep.subr.mxu0 %v310
    %435 = vmatpush2.msra.mxu0 %v309
    %436 = vmatprep.subr.mxu0 %v307
    %437 = vmatpush2.msra.mxu0 %v306
    %438 = vmatprep.subr.mxu0 %v304
    %439 = vmatpush2.msra.mxu0 %v303
    %440 = vmatprep.subr.mxu0 %v301
    %441 = vmatpush2.msra.mxu0 %v300
    %442 = vmatprep.subr.mxu0 %v298
    %443 = vmatpush2.msra.mxu0 %v297
    %444 = vmatprep.subr.mxu0 %v295
    %445 = vmatpush2.msra.mxu0 %v294
    %446 = vmatprep.subr.mxu0 %v292
    %447 = vmatpush2.msra.mxu0 %v291
    %448 = vmatprep.mubr.f32.mxu0 %v241
    %449 = vmatmul.mubr.f32.gmra.mxu0 %v240
    %v450 = vpop.f32.mrf.mxu0
    %v451 = vadd.f32 %v368, %v450
    %v452 = vpop.f32.mrf.mxu0
    %v453 = vadd.f32 %v372, %v452
    %454 = vdwg.mxu0
    %455 = vmatprep.subr.mxu0 0.0
    %456 = vmatpush1.msra.mxu0 0.0
    %457 = vmatprep.subr.mxu0 0.0
    %458 = vmatpush1.msra.mxu0 0.0
    %459 = vmatprep.subr.mxu0 0.0
    %460 = vmatpush1.msra.mxu0 0.0
    %461 = vmatprep.subr.mxu0 0.0
    %462 = vmatpush1.msra.mxu0 0.0
    %463 = vmatprep.subr.mxu0 0.0
    %464 = vmatpush1.msra.mxu0 0.0
    %465 = vmatprep.subr.mxu0 0.0
    %466 = vmatpush1.msra.mxu0 0.0
    %467 = vmatprep.subr.mxu0 0.0
    %468 = vmatpush1.msra.mxu0 0.0
    %469 = vmatprep.subr.mxu0 0.0
    %470 = vmatpush1.msra.mxu0 0.0
    %471 = vmatprep.subr.mxu0 %v361
    %472 = vmatpush1.msra.mxu0 %v360
    %473 = vmatprep.subr.mxu0 %v358
    %474 = vmatpush1.msra.mxu0 %v357
    %475 = vmatprep.subr.mxu0 %v355
    %476 = vmatpush1.msra.mxu0 %v354
    %477 = vmatprep.subr.mxu0 %v352
    %478 = vmatpush1.msra.mxu0 %v351
    %479 = vmatprep.subr.mxu0 %v349
    %480 = vmatpush1.msra.mxu0 %v348
    %481 = vmatprep.subr.mxu0 %v346
    %482 = vmatpush1.msra.mxu0 %v345
    %483 = vmatprep.subr.mxu0 %v343
    %484 = vmatpush1.msra.mxu0 %v342
    %485 = vmatprep.subr.mxu0 %v340
    %486 = vmatpush1.msra.mxu0 %v339
    %487 = vmatprep.subr.mxu0 0.0
    %488 = vmatpush2.msra.mxu0 0.0
    %489 = vmatprep.subr.mxu0 0.0
    %490 = vmatpush2.msra.mxu0 0.0
    %491 = vmatprep.subr.mxu0 0.0
    %492 = vmatpush2.msra.mxu0 0.0
    %493 = vmatprep.subr.mxu0 0.0
    %494 = vmatpush2.msra.mxu0 0.0
    %495 = vmatprep.subr.mxu0 0.0
    %496 = vmatpush2.msra.mxu0 0.0
    %497 = vmatprep.subr.mxu0 0.0
    %498 = vmatpush2.msra.mxu0 0.0
    %499 = vmatprep.subr.mxu0 0.0
    %500 = vmatpush2.msra.mxu0 0.0
    %501 = vmatprep.subr.mxu0 0.0
    %502 = vmatpush2.msra.mxu0 0.0
    %503 = vmatprep.subr.mxu0 0.0
    %504 = vmatpush2.msra.mxu0 0.0
    %505 = vmatprep.subr.mxu0 0.0
    %506 = vmatpush2.msra.mxu0 0.0
    %507 = vmatprep.subr.mxu0 0.0
    %508 = vmatpush2.msra.mxu0 0.0
    %509 = vmatprep.subr.mxu0 0.0
    %510 = vmatpush2.msra.mxu0 0.0
    %511 = vmatprep.subr.mxu0 0.0
    %512 = vmatpush2.msra.mxu0 0.0
    %513 = vmatprep.subr.mxu0 0.0
    %514 = vmatpush2.msra.mxu0 0.0
    %515 = vmatprep.subr.mxu0 0.0
    %516 = vmatpush2.msra.mxu0 0.0
    %517 = vmatprep.subr.mxu0 0.0
    %518 = vmatpush2.msra.mxu0 0.0
    %519 = vmatprep.mubr.f32.mxu0 0.0
    %520 = vmatmul.mubr.f32.gmra.mxu0 %v382
    %v521 = vpop.f32.mrf.mxu0
    %v522 = vadd.f32 %v451, %v521
    %v523 = vpop.f32.mrf.mxu0
    %v524 = vadd.f32 %v453, %v523
    %525 = vdwg.mxu0
    %526 = vmatprep.subr.mxu0 0.0
    %527 = vmatpush1.msra.mxu0 %v290
    %528 = vmatprep.subr.mxu0 0.0
    %529 = vmatpush1.msra.mxu0 %v287
    %530 = vmatprep.subr.mxu0 0.0
    %531 = vmatpush1.msra.mxu0 %v284
    %532 = vmatprep.subr.mxu0 0.0
    %533 = vmatpush1.msra.mxu0 %v281
    %534 = vmatprep.subr.mxu0 0.0
    %535 = vmatpush1.msra.mxu0 %v278
    %536 = vmatprep.subr.mxu0 0.0
    %537 = vmatpush1.msra.mxu0 %v275
    %538 = vmatprep.subr.mxu0 0.0
    %539 = vmatpush1.msra.mxu0 %v272
    %540 = vmatprep.subr.mxu0 0.0
    %541 = vmatpush1.msra.mxu0 %v269
    %542 = vmatprep.subr.mxu0 0.0
    %543 = vmatpush1.msra.mxu0 %v266
    %544 = vmatprep.subr.mxu0 0.0
    %545 = vmatpush1.msra.mxu0 %v263
    %546 = vmatprep.subr.mxu0 0.0
    %547 = vmatpush1.msra.mxu0 %v260
    %548 = vmatprep.subr.mxu0 0.0
    %549 = vmatpush1.msra.mxu0 %v257
    %550 = vmatprep.subr.mxu0 0.0
    %551 = vmatpush1.msra.mxu0 %v254
    %552 = vmatprep.subr.mxu0 0.0
    %553 = vmatpush1.msra.mxu0 %v251
    %554 = vmatprep.subr.mxu0 0.0
    %555 = vmatpush1.msra.mxu0 %v248
    %556 = vmatprep.subr.mxu0 0.0
    %557 = vmatpush1.msra.mxu0 %v245
    %558 = vmatprep.subr.mxu0 0.0
    %559 = vmatpush2.msra.mxu0 %v338
    %560 = vmatprep.subr.mxu0 0.0
    %561 = vmatpush2.msra.mxu0 %v335
    %562 = vmatprep.subr.mxu0 0.0
    %563 = vmatpush2.msra.mxu0 %v332
    %564 = vmatprep.subr.mxu0 0.0
    %565 = vmatpush2.msra.mxu0 %v329
    %566 = vmatprep.subr.mxu0 0.0
    %567 = vmatpush2.msra.mxu0 %v326
    %568 = vmatprep.subr.mxu0 0.0
    %569 = vmatpush2.msra.mxu0 %v323
    %570 = vmatprep.subr.mxu0 0.0
    %571 = vmatpush2.msra.mxu0 %v320
    %572 = vmatprep.subr.mxu0 0.0
    %573 = vmatpush2.msra.mxu0 %v317
    %574 = vmatprep.subr.mxu0 0.0
    %575 = vmatpush2.msra.mxu0 %v314
    %576 = vmatprep.subr.mxu0 0.0
    %577 = vmatpush2.msra.mxu0 %v311
    %578 = vmatprep.subr.mxu0 0.0
    %579 = vmatpush2.msra.mxu0 %v308
    %580 = vmatprep.subr.mxu0 0.0
    %581 = vmatpush2.msra.mxu0 %v305
    %582 = vmatprep.subr.mxu0 0.0
    %583 = vmatpush2.msra.mxu0 %v302
    %584 = vmatprep.subr.mxu0 0.0
    %585 = vmatpush2.msra.mxu0 %v299
    %586 = vmatprep.subr.mxu0 0.0
    %587 = vmatpush2.msra.mxu0 %v296
    %588 = vmatprep.subr.mxu0 0.0
    %589 = vmatpush2.msra.mxu0 %v293
    %590 = vmatprep.mubr.f32.mxu0 %v241
    %591 = vmatmul.mubr.f32.gmra.mxu0 %v240
    %v592 = vpop.f32.mrf.mxu0
    %v593 = vadd.f32 %v376, %v592
    %v594 = vpop.f32.mrf.mxu0
    %595 = vdwg.mxu0
    %596 = vmatprep.subr.mxu0 0.0
    %597 = vmatpush1.msra.mxu0 0.0
    %598 = vmatprep.subr.mxu0 0.0
    %599 = vmatpush1.msra.mxu0 0.0
    %600 = vmatprep.subr.mxu0 0.0
    %601 = vmatpush1.msra.mxu0 0.0
    %602 = vmatprep.subr.mxu0 0.0
    %603 = vmatpush1.msra.mxu0 0.0
    %604 = vmatprep.subr.mxu0 0.0
    %605 = vmatpush1.msra.mxu0 0.0
    %606 = vmatprep.subr.mxu0 0.0
    %607 = vmatpush1.msra.mxu0 0.0
    %608 = vmatprep.subr.mxu0 0.0
    %609 = vmatpush1.msra.mxu0 0.0
    %610 = vmatprep.subr.mxu0 0.0
    %611 = vmatpush1.msra.mxu0 0.0
    %612 = vmatprep.subr.mxu0 0.0
    %613 = vmatpush1.msra.mxu0 %v362
    %614 = vmatprep.subr.mxu0 0.0
    %615 = vmatpush1.msra.mxu0 %v359
    %616 = vmatprep.subr.mxu0 0.0
    %617 = vmatpush1.msra.mxu0 %v356
    %618 = vmatprep.subr.mxu0 0.0
    %619 = vmatpush1.msra.mxu0 %v353
    %620 = vmatprep.subr.mxu0 0.0
    %621 = vmatpush1.msra.mxu0 %v350
    %622 = vmatprep.subr.mxu0 0.0
    %623 = vmatpush1.msra.mxu0 %v347
    %624 = vmatprep.subr.mxu0 0.0
    %625 = vmatpush1.msra.mxu0 %v344
    %626 = vmatprep.subr.mxu0 0.0
    %627 = vmatpush1.msra.mxu0 %v341
    %628 = vmatprep.subr.mxu0 0.0
    %629 = vmatpush2.msra.mxu0 0.0
    %630 = vmatprep.subr.mxu0 0.0
    %631 = vmatpush2.msra.mxu0 0.0
    %632 = vmatprep.subr.mxu0 0.0
    %633 = vmatpush2.msra.mxu0 0.0
    %634 = vmatprep.subr.mxu0 0.0
    %635 = vmatpush2.msra.mxu0 0.0
    %636 = vmatprep.subr.mxu0 0.0
    %637 = vmatpush2.msra.mxu0 0.0
    %638 = vmatprep.subr.mxu0 0.0
    %639 = vmatpush2.msra.mxu0 0.0
    %640 = vmatprep.subr.mxu0 0.0
    %641 = vmatpush2.msra.mxu0 0.0
    %642 = vmatprep.subr.mxu0 0.0
    %643 = vmatpush2.msra.mxu0 0.0
    %644 = vmatprep.subr.mxu0 0.0
    %645 = vmatpush2.msra.mxu0 0.0
    %646 = vmatprep.subr.mxu0 0.0
    %647 = vmatpush2.msra.mxu0 0.0
    %648 = vmatprep.subr.mxu0 0.0
    %649 = vmatpush2.msra.mxu0 0.0
    %650 = vmatprep.subr.mxu0 0.0
    %651 = vmatpush2.msra.mxu0 0.0
    %652 = vmatprep.subr.mxu0 0.0
    %653 = vmatpush2.msra.mxu0 0.0
    %654 = vmatprep.subr.mxu0 0.0
    %655 = vmatpush2.msra.mxu0 0.0
    %656 = vmatprep.subr.mxu0 0.0
    %657 = vmatpush2.msra.mxu0 0.0
    %658 = vmatprep.subr.mxu0 0.0
    %659 = vmatpush2.msra.mxu0 0.0
    %660 = vmatprep.mubr.f32.mxu0 0.0
    %661 = vmatmul.mubr.f32.gmra.mxu0 %v382
    %v662 = vpop.f32.mrf.mxu0
    %v663 = vadd.f32 %v593, %v662
    %v664 = vpop.f32.mrf.mxu0
    %665 = vdwg.mxu0
    %v666 = vmax.f32 %v522, 0.0
    %v667 = vmax.f32 %v524, 0.0
    %v668 = vmax.f32 %v663, 0.0
    %v669 = vld [vmem:[%s5] sm:$0xff]
    %v670 = vld [vmem:[%s5 + $0x8] sm:$0xff]
    %v671 = vld [vmem:[%s5 + $0x10] sm:$0xff]
    %v672 = vld [vmem:[%s5 + $0x18] sm:$0xff]
    %v673 = vld [vmem:[%s5 + $0x20] sm:$0xff]
    %v674 = vld [vmem:[%s5 + $0x28] sm:$0xff]
    %v675 = vld [vmem:[%s5 + $0x30] sm:$0xff]
    %v676 = vld [vmem:[%s5 + $0x38] sm:$0xff]
    %v677 = vld [vmem:[%s5 + $0x40] sm:$0xff]
    %v678 = vld [vmem:[%s5 + $0x48] sm:$0xff]
    %v679 = vld [vmem:[%s5 + $0x50] sm:$0xff]
    %v680 = vld [vmem:[%s5 + $0x58] sm:$0xff]
    %v681 = vld [vmem:[%s5 + $0x60] sm:$0xff]
    %v682 = vld [vmem:[%s5 + $0x68] sm:$0xff]
    %v683 = vld [vmem:[%s5 + $0x70] sm:$0xff]
    %v684 = vld [vmem:[%s5 + $0x78] sm:$0xff]
    %v685 = vld [vmem:[%s5 + $0x80] sm:$0xff]
    %v686 = vld [vmem:[%s5 + $0x88] sm:$0xff]
    %v687 = vld [vmem:[%s5 + $0x90] sm:$0xff]
    %v688 = vld [vmem:[%s5 + $0x98] sm:$0xff]
    %v689 = vld [vmem:[%s5 + $0xa0] sm:$0xff]
    %v690 = vld [vmem:[%s5 + $0xa8] sm:$0xff]
    %v691 = vld [vmem:[%s5 + $0xb0] sm:$0xff]
    %v692 = vld [vmem:[%s5 + $0xb8] sm:$0xff]
    %v693 = vld [vmem:[%s5 + $0xc0] sm:$0xff]
    %v694 = vld [vmem:[%s5 + $0xc8] sm:$0xff]
    %v695 = vld [vmem:[%s5 + $0xd0] sm:$0xff]
    %v696 = vld [vmem:[%s5 + $0xd8] sm:$0xff]
    %v697 = vld [vmem:[%s5 + $0xe0] sm:$0xff]
    %v698 = vld [vmem:[%s5 + $0xe8] sm:$0xff]
    %v699 = vld [vmem:[%s5 + $0xf0] sm:$0xff]
    %v700 = vld [vmem:[%s5 + $0xf8] sm:$0xff]
    %v701 = vld [vmem:[%s5 + $0x100] sm:$0xff]
    %v702 = vld [vmem:[%s5 + $0x108] sm:$0xff]
    %v703 = vld [vmem:[%s5 + $0x110] sm:$0xff]
    %v704 = vld [vmem:[%s5 + $0x118] sm:$0xff]
    %v705 = vld [vmem:[%s5 + $0x120] sm:$0xff]
    %v706 = vld [vmem:[%s5 + $0x128] sm:$0xff]
    %v707 = vld [vmem:[%s5 + $0x130] sm:$0xff]
    %v708 = vld [vmem:[%s5 + $0x138] sm:$0xff]
    %v709 = vld [vmem:[%s5 + $0x140] sm:$0xff]
    %v710 = vld [vmem:[%s5 + $0x148] sm:$0xff]
    %v711 = vld [vmem:[%s5 + $0x150] sm:$0xff]
    %v712 = vld [vmem:[%s5 + $0x158] sm:$0xff]
    %v713 = vld [vmem:[%s5 + $0x160] sm:$0xff]
    %v714 = vld [vmem:[%s5 + $0x168] sm:$0xff]
    %v715 = vld [vmem:[%s5 + $0x170] sm:$0xff]
    %v716 = vld [vmem:[%s5 + $0x178] sm:$0xff]
    %v717 = vld [vmem:[%s5 + $0x180] sm:$0xff]
    %v718 = vld [vmem:[%s5 + $0x188] sm:$0xff]
    %v719 = vld [vmem:[%s5 + $0x190] sm:$0xff]
    %v720 = vld [vmem:[%s5 + $0x198] sm:$0xff]
    %v721 = vld [vmem:[%s5 + $0x1a0] sm:$0xff]
    %v722 = vld [vmem:[%s5 + $0x1a8] sm:$0xff]
    %v723 = vld [vmem:[%s5 + $0x1b0] sm:$0xff]
    %v724 = vld [vmem:[%s5 + $0x1b8] sm:$0xff]
    %v725 = vld [vmem:[%s5 + $0x1c0] sm:$0xff]
    %v726 = vld [vmem:[%s5 + $0x1c8] sm:$0xff]
    %v727 = vld [vmem:[%s5 + $0x1d0] sm:$0xff]
    %v728 = vld [vmem:[%s5 + $0x1d8] sm:$0xff]
    %v729 = vld [vmem:[%s5 + $0x1e0] sm:$0xff]
    %v730 = vld [vmem:[%s5 + $0x1e8] sm:$0xff]
    %v731 = vld [vmem:[%s5 + $0x1f0] sm:$0xff]
    %v732 = vld [vmem:[%s5 + $0x1f8] sm:$0xff]
    %v733 = vld [vmem:[%s5 + $0x200] sm:$0xff]
    %v734 = vld [vmem:[%s5 + $0x208] sm:$0xff]
    %v735 = vld [vmem:[%s5 + $0x210] sm:$0xff]
    %v736 = vld [vmem:[%s5 + $0x218] sm:$0xff]
    %v737 = vld [vmem:[%s5 + $0x220] sm:$0xff]
    %v738 = vld [vmem:[%s5 + $0x228] sm:$0xff]
    %v739 = vld [vmem:[%s5 + $0x230] sm:$0xff]
    %v740 = vld [vmem:[%s5 + $0x238] sm:$0xff]
    %v741 = vld [vmem:[%s5 + $0x240] sm:$0xff]
    %v742 = vld [vmem:[%s5 + $0x248] sm:$0xff]
    %v743 = vld [vmem:[%s5 + $0x250] sm:$0xff]
    %v744 = vld [vmem:[%s5 + $0x258] sm:$0xff]
    %v745 = vld [vmem:[%s5 + $0x260] sm:$0xff]
    %v746 = vld [vmem:[%s5 + $0x268] sm:$0xff]
    %v747 = vld [vmem:[%s5 + $0x270] sm:$0xff]
    %v748 = vld [vmem:[%s5 + $0x278] sm:$0xff]
    %v749 = vld [vmem:[%s6] sm:$0x3]
    %v751 = vlaneseq
    %v752 = vshrl.u32 %v751, 7
    %v753 = vsub.s32 0, %v752
    %v754 = vrot.slane %v749, %v753
    %v755 = vlaneseq
    %v756 = vshrl.u32 %v755, 7
    %v757 = vsub.s32 1, %v756
    %v758 = vrot.slane %v749, %v757
    %v762 = vsel %vm380, %v668, 0
    %764 = vmatprep.subr.mxu0 %v700
    %765 = vmatpush1.msra.mxu0 %v699
    %766 = vmatprep.subr.mxu0 %v698
    %767 = vmatpush1.msra.mxu0 %v697
    %768 = vmatprep.subr.mxu0 %v696
    %769 = vmatpush1.msra.mxu0 %v695
    %770 = vmatprep.subr.mxu0 %v694
    %771 = vmatpush1.msra.mxu0 %v693
    %772 = vmatprep.subr.mxu0 %v692
    %773 = vmatpush1.msra.mxu0 %v691
    %774 = vmatprep.subr.mxu0 %v690
    %775 = vmatpush1.msra.mxu0 %v689
    %776 = vmatprep.subr.mxu0 %v688
    %777 = vmatpush1.msra.mxu0 %v687
    %778 = vmatprep.subr.mxu0 %v686
    %779 = vmatpush1.msra.mxu0 %v685
    %780 = vmatprep.subr.mxu0 %v684
    %781 = vmatpush1.msra.mxu0 %v683
    %782 = vmatprep.subr.mxu0 %v682
    %783 = vmatpush1.msra.mxu0 %v681
    %784 = vmatprep.subr.mxu0 %v680
    %785 = vmatpush1.msra.mxu0 %v679
    %786 = vmatprep.subr.mxu0 %v678
    %787 = vmatpush1.msra.mxu0 %v677
    %788 = vmatprep.subr.mxu0 %v676
    %789 = vmatpush1.msra.mxu0 %v675
    %790 = vmatprep.subr.mxu0 %v674
    %791 = vmatpush1.msra.mxu0 %v673
    %792 = vmatprep.subr.mxu0 %v672
    %793 = vmatpush1.msra.mxu0 %v671
    %794 = vmatprep.subr.mxu0 %v670
    %795 = vmatpush1.msra.mxu0 %v669
    %796 = vmatprep.subr.mxu0 %v732
    %797 = vmatpush2.msra.mxu0 %v731
    %798 = vmatprep.subr.mxu0 %v730
    %799 = vmatpush2.msra.mxu0 %v729
    %800 = vmatprep.subr.mxu0 %v728
    %801 = vmatpush2.msra.mxu0 %v727
    %802 = vmatprep.subr.mxu0 %v726
    %803 = vmatpush2.msra.mxu0 %v725
    %804 = vmatprep.subr.mxu0 %v724
    %805 = vmatpush2.msra.mxu0 %v723
    %806 = vmatprep.subr.mxu0 %v722
    %807 = vmatpush2.msra.mxu0 %v721
    %808 = vmatprep.subr.mxu0 %v720
    %809 = vmatpush2.msra.mxu0 %v719
    %810 = vmatprep.subr.mxu0 %v718
    %811 = vmatpush2.msra.mxu0 %v717
    %812 = vmatprep.subr.mxu0 %v716
    %813 = vmatpush2.msra.mxu0 %v715
    %814 = vmatprep.subr.mxu0 %v714
    %815 = vmatpush2.msra.mxu0 %v713
    %816 = vmatprep.subr.mxu0 %v712
    %817 = vmatpush2.msra.mxu0 %v711
    %818 = vmatprep.subr.mxu0 %v710
    %819 = vmatpush2.msra.mxu0 %v709
    %820 = vmatprep.subr.mxu0 %v708
    %821 = vmatpush2.msra.mxu0 %v707
    %822 = vmatprep.subr.mxu0 %v706
    %823 = vmatpush2.msra.mxu0 %v705
    %824 = vmatprep.subr.mxu0 %v704
    %825 = vmatpush2.msra.mxu0 %v703
    %826 = vmatprep.subr.mxu0 %v702
    %827 = vmatpush2.msra.mxu0 %v701
    %828 = vmatprep.mubr.f32.mxu0 %v667
    %829 = vmatmul.mubr.f32.gmra.mxu0 %v666
    %v830 = vpop.f32.mrf.mxu0
    %v831 = vadd.f32 %v754, %v830
    %v832 = vpop.f32.mrf.mxu0
    %v833 = vadd.f32 %v758, %v832
    %834 = vdwg.mxu0
    %835 = vmatprep.subr.mxu0 0.0
    %836 = vmatpush1.msra.mxu0 0.0
    %837 = vmatprep.subr.mxu0 0.0
    %838 = vmatpush1.msra.mxu0 0.0
    %839 = vmatprep.subr.mxu0 0.0
    %840 = vmatpush1.msra.mxu0 0.0
    %841 = vmatprep.subr.mxu0 0.0
    %842 = vmatpush1.msra.mxu0 0.0
    %843 = vmatprep.subr.mxu0 0.0
    %844 = vmatpush1.msra.mxu0 0.0
    %845 = vmatprep.subr.mxu0 0.0
    %846 = vmatpush1.msra.mxu0 0.0
    %847 = vmatprep.subr.mxu0 0.0
    %848 = vmatpush1.msra.mxu0 0.0
    %849 = vmatprep.subr.mxu0 0.0
    %850 = vmatpush1.msra.mxu0 0.0
    %851 = vmatprep.subr.mxu0 %v748
    %852 = vmatpush1.msra.mxu0 %v747
    %853 = vmatprep.subr.mxu0 %v746
    %854 = vmatpush1.msra.mxu0 %v745
    %855 = vmatprep.subr.mxu0 %v744
    %856 = vmatpush1.msra.mxu0 %v743
    %857 = vmatprep.subr.mxu0 %v742
    %858 = vmatpush1.msra.mxu0 %v741
    %859 = vmatprep.subr.mxu0 %v740
    %860 = vmatpush1.msra.mxu0 %v739
    %861 = vmatprep.subr.mxu0 %v738
    %862 = vmatpush1.msra.mxu0 %v737
    %863 = vmatprep.subr.mxu0 %v736
    %864 = vmatpush1.msra.mxu0 %v735
    %865 = vmatprep.subr.mxu0 %v734
    %866 = vmatpush1.msra.mxu0 %v733
    %867 = vmatprep.subr.mxu0 0.0
    %868 = vmatpush2.msra.mxu0 0.0
    %869 = vmatprep.subr.mxu0 0.0
    %870 = vmatpush2.msra.mxu0 0.0
    %871 = vmatprep.subr.mxu0 0.0
    %872 = vmatpush2.msra.mxu0 0.0
    %873 = vmatprep.subr.mxu0 0.0
    %874 = vmatpush2.msra.mxu0 0.0
    %875 = vmatprep.subr.mxu0 0.0
    %876 = vmatpush2.msra.mxu0 0.0
    %877 = vmatprep.subr.mxu0 0.0
    %878 = vmatpush2.msra.mxu0 0.0
    %879 = vmatprep.subr.mxu0 0.0
    %880 = vmatpush2.msra.mxu0 0.0
    %881 = vmatprep.subr.mxu0 0.0
    %882 = vmatpush2.msra.mxu0 0.0
    %883 = vmatprep.subr.mxu0 0.0
    %884 = vmatpush2.msra.mxu0 0.0
    %885 = vmatprep.subr.mxu0 0.0
    %886 = vmatpush2.msra.mxu0 0.0
    %887 = vmatprep.subr.mxu0 0.0
    %888 = vmatpush2.msra.mxu0 0.0
    %889 = vmatprep.subr.mxu0 0.0
    %890 = vmatpush2.msra.mxu0 0.0
    %891 = vmatprep.subr.mxu0 0.0
    %892 = vmatpush2.msra.mxu0 0.0
    %893 = vmatprep.subr.mxu0 0.0
    %894 = vmatpush2.msra.mxu0 0.0
    %895 = vmatprep.subr.mxu0 0.0
    %896 = vmatpush2.msra.mxu0 0.0
    %897 = vmatprep.subr.mxu0 0.0
    %898 = vmatpush2.msra.mxu0 0.0
    %899 = vmatprep.mubr.f32.mxu0 0.0
    %900 = vmatmul.mubr.f32.gmra.mxu0 %v762
    %v901 = vpop.f32.mrf.mxu0
    %v902 = vadd.f32 %v831, %v901
    %v903 = vpop.f32.mrf.mxu0
    %v904 = vadd.f32 %v833, %v903
    %905 = vdwg.mxu0
    %v906 = vmax.f32 %v902, 0.0
    %v907 = vmax.f32 %v904, 0.0
    %v908 = vld [vmem:[%s7] sm:$0xff]
    %v909 = vld [vmem:[%s7 + $0x8] sm:$0xff]
    %v910 = vld [vmem:[%s7 + $0x10] sm:$0xff]
    %v911 = vld [vmem:[%s7 + $0x18] sm:$0xff]
    %v912 = vld [vmem:[%s7 + $0x20] sm:$0xff]
    %v913 = vld [vmem:[%s7 + $0x28] sm:$0xff]
    %v914 = vld [vmem:[%s7 + $0x30] sm:$0xff]
    %v915 = vld [vmem:[%s7 + $0x38] sm:$0xff]
    %v916 = vld [vmem:[%s7 + $0x40] sm:$0xff]
    %v917 = vld [vmem:[%s7 + $0x48] sm:$0xff]
    %v918 = vld [vmem:[%s7 + $0x50] sm:$0xff]
    %v919 = vld [vmem:[%s7 + $0x58] sm:$0xff]
    %v920 = vld [vmem:[%s7 + $0x60] sm:$0xff]
    %v921 = vld [vmem:[%s7 + $0x68] sm:$0xff]
    %v922 = vld [vmem:[%s7 + $0x70] sm:$0xff]
    %v923 = vld [vmem:[%s7 + $0x78] sm:$0xff]
    %v924 = vld [vmem:[%s7 + $0x80] sm:$0xff]
    %v925 = vld [vmem:[%s7 + $0x88] sm:$0xff]
    %v926 = vld [vmem:[%s7 + $0x90] sm:$0xff]
    %v927 = vld [vmem:[%s7 + $0x98] sm:$0xff]
    %v928 = vld [vmem:[%s8] sm:$0x1]
    %v930 = vlaneseq
    %v931 = vshrl.u32 %v930, 7
    %v932 = vsub.s32 0, %v931
    %v933 = vrot.slane %v928, %v932
    %vm935 = vcmask 261120
    %v937 = vsel %vm935, %v907, 0
    %939 = vmatprep.subr.mxu0 0.0
    %940 = vmatpush1.msra.mxu0 %v923
    %941 = vmatprep.subr.mxu0 0.0
    %942 = vmatpush1.msra.mxu0 %v922
    %943 = vmatprep.subr.mxu0 0.0
    %944 = vmatpush1.msra.mxu0 %v921
    %945 = vmatprep.subr.mxu0 0.0
    %946 = vmatpush1.msra.mxu0 %v920
    %947 = vmatprep.subr.mxu0 0.0
    %948 = vmatpush1.msra.mxu0 %v919
    %949 = vmatprep.subr.mxu0 0.0
    %950 = vmatpush1.msra.mxu0 %v918
    %951 = vmatprep.subr.mxu0 0.0
    %952 = vmatpush1.msra.mxu0 %v917
    %953 = vmatprep.subr.mxu0 0.0
    %954 = vmatpush1.msra.mxu0 %v916
    %955 = vmatprep.subr.mxu0 0.0
    %956 = vmatpush1.msra.mxu0 %v915
    %957 = vmatprep.subr.mxu0 0.0
    %958 = vmatpush1.msra.mxu0 %v914
    %959 = vmatprep.subr.mxu0 0.0
    %960 = vmatpush1.msra.mxu0 %v913
    %961 = vmatprep.subr.mxu0 0.0
    %962 = vmatpush1.msra.mxu0 %v912
    %963 = vmatprep.subr.mxu0 0.0
    %964 = vmatpush1.msra.mxu0 %v911
    %965 = vmatprep.subr.mxu0 0.0
    %966 = vmatpush1.msra.mxu0 %v910
    %967 = vmatprep.subr.mxu0 0.0
    %968 = vmatpush1.msra.mxu0 %v909
    %969 = vmatprep.subr.mxu0 0.0
    %970 = vmatpush1.msra.mxu0 %v908
    %971 = vmatprep.subr.mxu0 0.0
    %972 = vmatpush2.msra.mxu0 0.0
    %973 = vmatprep.subr.mxu0 0.0
    %974 = vmatpush2.msra.mxu0 0.0
    %975 = vmatprep.subr.mxu0 0.0
    %976 = vmatpush2.msra.mxu0 0.0
    %977 = vmatprep.subr.mxu0 0.0
    %978 = vmatpush2.msra.mxu0 0.0
    %979 = vmatprep.subr.mxu0 0.0
    %980 = vmatpush2.msra.mxu0 0.0
    %981 = vmatprep.subr.mxu0 0.0
    %982 = vmatpush2.msra.mxu0 0.0
    %983 = vmatprep.subr.mxu0 0.0
    %984 = vmatpush2.msra.mxu0 0.0
    %985 = vmatprep.subr.mxu0 0.0
    %986 = vmatpush2.msra.mxu0 0.0
    %987 = vmatprep.subr.mxu0 0.0
    %988 = vmatpush2.msra.mxu0 0.0
    %989 = vmatprep.subr.mxu0 0.0
    %990 = vmatpush2.msra.mxu0 0.0
    %991 = vmatprep.subr.mxu0 0.0
    %992 = vmatpush2.msra.mxu0 0.0
    %993 = vmatprep.subr.mxu0 0.0
    %994 = vmatpush2.msra.mxu0 0.0
    %995 = vmatprep.subr.mxu0 0.0
    %996 = vmatpush2.msra.mxu0 %v927
    %997 = vmatprep.subr.mxu0 0.0
    %998 = vmatpush2.msra.mxu0 %v926
    %999 = vmatprep.subr.mxu0 0.0
    %1000 = vmatpush2.msra.mxu0 %v925
    %1001 = vmatprep.subr.mxu0 0.0
    %1002 = vmatpush2.msra.mxu0 %v924
    %1003 = vmatprep.mubr.f32.mxu0 %v937
    %1004 = vmatmul.mubr.f32.gmra.mxu0 %v906
    %v1005 = vpop.f32.mrf.mxu0
    %v1006 = vadd.f32 %v933, %v1005
    %v1007 = vpop.f32.mrf.mxu0
    %1008 = vdwg.mxu0
    %1009 = vst.msk [vmem:[#allocation2] sm:$0xff] %vm935, %v1006
    // Predicated region
    $region38: #{tpu_custom_call.1} parent=1 // pred_check
      _
    $region39: #{tpu_custom_call.1} parent=1 // pred_check_branch
      %1011 = sbr.rel (0) target = $region41
    $region40: #{tpu_custom_call.1} parent=1 // pred_region
      %s1013 = ssub.s32 128, 128
      %1014 = vsyncadd [#allocation3], %s1013
      %s1016 = sshll.u32 [#allocation2], 4
      %s1017 = int_to_ptr.vmem [resolvable:$true] %s1016
      %1019 = dma.vmem_to_hbm [thread:$0]  %s1017, 128, %s9, [#allocation3]
    $region41: #{tpu_custom_call.1} parent=1 // pred_fallthru
      _
    // Predicated region
    $region42: #{tpu_custom_call.1} parent=1 // pred_check
      _
    $region43: #{tpu_custom_call.1} parent=1 // pred_check_branch
      %1021 = sbr.rel (0) target = $region45
    $region44: #{tpu_custom_call.1} parent=1 // pred_region
      %1022 = dma.done [#allocation3], 128
    $region45: #{tpu_custom_call.1} parent=1 // pred_fallthru
      _
    %1023 = vsyncpa [#allocation3], 1

</llo_original>
